<compile_context>
chip_gen: v7x
topology: tpu7x:2x2x1
jax: 0.10.0
libtpu: 0.0.40
codegen_flags: <defaults>
</compile_context>

<pallas_src>
import functools

import jax
import jax.numpy as jnp
from jax.experimental import pallas as pl
from jax.experimental.pallas import tpu as pltpu


# ----------------------------- Fused Pallas kernel ---------------------------

def _fused_graphsage_kernel(xin_ref, win_ref, adj_ref, wlr_ref, bconv_ref,
                            wclf_ref, bclf_ref, logits_ref, emb_ref,
                            *, n_user, hid):
    f32 = jnp.float32
    bf16 = jnp.bfloat16

    # (1) Input projections (+ biases, folded via homogeneous columns) for all
    #     three node types with one block-structured matmul.
    h = jnp.dot(xin_ref[...], win_ref[...], preferred_element_type=f32)   # (n_all, hid) f32
    h_bf = h.astype(bf16)

    # (2) Mean aggregation: every edge type has `user` as message source, so
    #     the three row-normalized adjacencies are stacked along dst -> 1 matmul.
    agg = jnp.dot(adj_ref[...], h_bf[0:n_user, :],
                  preferred_element_type=f32)                              # (n_all, hid) f32

    # (3) All three SAGE convs at once, no lane concat: two accumulated K=hid
    #     dots against the column-stacked weight slabs + column-stacked bias.
    #       big[:, 0:hid]        -> weights of (user->user)
    #       big[:, hid:2*hid]    -> weights of (user->pc)
    #       big[:, 2*hid:3*hid]  -> weights of (user->url)
    big = (jnp.dot(agg.astype(bf16), wlr_ref[0:hid, :], preferred_element_type=f32)
           + jnp.dot(h_bf, wlr_ref[hid:2 * hid, :], preferred_element_type=f32)
           + bconv_ref[...])                                               # (n_all, 256) f32
    emb_ref[...] = big.astype(emb_ref.dtype)                               # lane-dense store

    # (4) Classifier (Linear -> ReLU -> Linear) on user embeddings
    #     (user row-block x user col-block of `big`); 128-lane padded weights.
    y_u = big[0:n_user, 0:hid].astype(bf16)
    hc = jnp.maximum(
        jnp.dot(y_u, wclf_ref[0:hid, :], preferred_element_type=f32)
        + bclf_ref[0:1, :], 0.0)
    logits = (jnp.dot(hc.astype(bf16), wclf_ref[hid:, :], preferred_element_type=f32)
              + bclf_ref[1:2, :])
    logits_ref[...] = logits.astype(logits_ref.dtype)                      # lane-dense store


# ------------------------------ Wrapper ---------------------------------------

def _full_spec(shape):
    return pl.BlockSpec(shape, lambda i: (0,) * len(shape))


def graphsage_forward(inputs, *, n_user, n_pc, n_url, hid, out_dim):
    """inputs: 7 pre-packed kernel operands (see prep in __main__)."""
    xin, win, adj, wlr, bconv, wclf, bclf = inputs
    n_all = n_user + n_pc + n_url
    conv_pad = wlr.shape[1]    # 256: lane-dense width of the conv output slab
    clf_pad = wclf.shape[1]    # 128: lane-dense classifier width

    kern = functools.partial(_fused_graphsage_kernel, n_user=n_user, hid=hid)

    logits_pad, big = pl.pallas_call(
        kern,
        grid=(1,),
        in_specs=[_full_spec(a.shape) for a in inputs],
        out_specs=(_full_spec((n_user, clf_pad)), _full_spec((n_all, conv_pad))),
        out_shape=(jax.ShapeDtypeStruct((n_user, clf_pad), jnp.float32),
                   jax.ShapeDtypeStruct((n_all, conv_pad), jnp.float32)),
        compiler_params=pltpu.CompilerParams(dimension_semantics=("arbitrary",)),
    )(*inputs)

    logits = logits_pad[:, :out_dim]
    emb_user = big[:n_user, 0:hid]
    emb_pc = big[n_user:n_user + n_pc, hid:2 * hid]
    emb_url = big[n_user + n_pc:, 2 * hid:3 * hid]
    return logits, (emb_user, emb_pc, emb_url)


# ------------------------------ Glue (plain JAX) ------------------------------

def build_mean_adj(edge_index, n_src, n_dst):
    """Row-normalized dense adjacency: adj[i, j] = count(j->i) / in_deg(i)."""
    src, dst = edge_index[0], edge_index[1]
    adj = jnp.zeros((n_dst, n_src), jnp.float32).at[dst, src].add(1.0)
    deg = adj.sum(axis=1, keepdims=True)
    return adj / jnp.maximum(deg, 1.0)


def pad_cols(x, total):
    return jnp.pad(x, ((0, 0), (0, total - x.shape[1])))


def pad_rows(w, total):
    return jnp.pad(w, ((0, total - w.shape[0]), (0, 0)))


def lin_init(key, fan_in, fan_out):
    """PyTorch-style Linear init: U(-1/sqrt(fan_in), 1/sqrt(fan_in)); W stored (in, out)."""
    k1, k2 = jax.random.split(key)
    lim = 1.0 / jnp.sqrt(jnp.float32(fan_in))
    w = jax.random.uniform(k1, (fan_in, fan_out), jnp.float32, -lim, lim)
    b = jax.random.uniform(k2, (1, fan_out), jnp.float32, -lim, lim)
    return w, b


# ------------------------------ Reference -------------------------------------

def reference_forward(x_user, x_pc, x_url, adj_uu, adj_upc, adj_uurl, p):
    xu = x_user @ p["w_user"] + p["b_user"]
    xp = x_pc @ p["w_pc"] + p["b_pc"]
    xr = x_url @ p["w_url"] + p["b_url"]
    yu = (adj_uu @ xu) @ p["wl_uu"] + xu @ p["wr_uu"] + p["bl_uu"]
    yp = (adj_upc @ xu) @ p["wl_up"] + xp @ p["wr_up"] + p["bl_up"]
    yr = (adj_uurl @ xu) @ p["wl_ur"] + xr @ p["wr_ur"] + p["bl_ur"]
    h = jnp.maximum(yu @ p["w1"] + p["b1"], 0.0)
    logits = h @ p["w2"] + p["b2"]
    return logits, yu, yp, yr


# ------------------------------ Main -------------------------------------------

if __name__ == "__main__":
    HID, OUT = 64, 2
    N_USER, N_PC, N_URL = 16, 8, 8
    F_USER, F_PC, F_URL = 6, 4, 3
    F_PAD = 8          # per-type feature block width inside the block-diagonal slab
    CONV_PAD = 256     # lane-dense width of the packed conv output slab (3*HID -> 256)
    CLF_PAD = 128      # lane-dense classifier width (sliced back to OUT)

    key = jax.random.PRNGKey(0)
    ks = jax.random.split(key, 16)

    # --- raw parameters (deterministic) ---
    w_user, b_user = lin_init(ks[0], F_USER, HID)
    w_pc, b_pc = lin_init(ks[1], F_PC, HID)
    w_url, b_url = lin_init(ks[2], F_URL, HID)

    wl_uu, bl_uu = lin_init(ks[3], HID, HID)
    wr_uu, _ = lin_init(ks[4], HID, HID)          # root weight has no bias
    wl_up, bl_up = lin_init(ks[5], HID, HID)
    wr_up, _ = lin_init(ks[6], HID, HID)
    wl_ur, bl_ur = lin_init(ks[7], HID, HID)
    wr_ur, _ = lin_init(ks[8], HID, HID)

    w1, b1 = lin_init(ks[9], HID, HID // 2)
    w2, b2 = lin_init(ks[10], HID // 2, OUT)

    raw = {
        "w_user": w_user, "b_user": b_user, "w_pc": w_pc, "b_pc": b_pc,
        "w_url": w_url, "b_url": b_url,
        "wl_uu": wl_uu, "wr_uu": wr_uu, "bl_uu": bl_uu,
        "wl_up": wl_up, "wr_up": wr_up, "bl_up": bl_up,
        "wl_ur": wl_ur, "wr_ur": wr_ur, "bl_ur": bl_ur,
        "w1": w1, "b1": b1, "w2": w2, "b2": b2,
    }

    # --- node features ---
    x_user = jax.random.normal(ks[11], (N_USER, F_USER), jnp.float32)
    x_pc = jax.random.normal(ks[12], (N_PC, F_PC), jnp.float32)
    x_url = jax.random.normal(ks[13], (N_URL, F_URL), jnp.float32)

    # --- edge indices (row 0 = src, row 1 = dst) ---
    e_uu = jnp.stack([jax.random.randint(ks[14], (40,), 0, N_USER),
                      jax.random.randint(jax.random.fold_in(ks[14], 1), (40,), 0, N_USER)])
    e_upc = jnp.stack([jax.random.randint(ks[15], (30,), 0, N_USER),
                       jax.random.randint(jax.random.fold_in(ks[15], 1), (30,), 0, N_PC)])
    e_uurl = jnp.stack([jax.random.randint(jax.random.fold_in(ks[15], 2), (24,), 0, N_USER),
                        jax.random.randint(jax.random.fold_in(ks[15], 3), (24,), 0, N_URL)])

    adj_uu = build_mean_adj(e_uu, N_USER, N_USER)
    adj_upc = build_mean_adj(e_upc, N_USER, N_PC)
    adj_uurl = build_mean_adj(e_uurl, N_USER, N_URL)

    n_all = N_USER + N_PC + N_URL

    # --- one-time kernel operand packing (plain JAX) ---

    # xin: block-diagonal features + a homogeneous '1' column per type block;
    # win: row-stacked projection weights with the matching bias row.
    k_in = 3 * F_PAD
    xin = jnp.zeros((n_all, k_in), jnp.float32)
    xin = xin.at[:N_USER, 0:F_USER].set(x_user)
    xin = xin.at[:N_USER, F_USER].set(1.0)
    xin = xin.at[N_USER:N_USER + N_PC, F_PAD:F_PAD + F_PC].set(x_pc)
    xin = xin.at[N_USER:N_USER + N_PC, F_PAD + F_PC].set(1.0)
    xin = xin.at[N_USER + N_PC:, 2 * F_PAD:2 * F_PAD + F_URL].set(x_url)
    xin = xin.at[N_USER + N_PC:, 2 * F_PAD + F_URL].set(1.0)

    win = jnp.zeros((k_in, HID), jnp.float32)
    win = win.at[0:F_USER, :].set(w_user)
    win = win.at[F_USER, :].set(b_user[0])
    win = win.at[F_PAD:F_PAD + F_PC, :].set(w_pc)
    win = win.at[F_PAD + F_PC, :].set(b_pc[0])
    win = win.at[2 * F_PAD:2 * F_PAD + F_URL, :].set(w_url)
    win = win.at[2 * F_PAD + F_URL, :].set(b_url[0])

    # stacked row-normalized adjacency: all three convs use `user` as source
    adj = jnp.concatenate([adj_uu, adj_upc, adj_uurl], axis=0)            # (n_all, N_USER)

    # column-stacked W_l / W_r slabs for the three edge types, row-stacked into
    # a single operand; padded to 256 lanes (lane-dense conv output slab).
    wl_slab = jnp.concatenate([wl_uu, wl_up, wl_ur], axis=1)              # (HID, 3*HID)
    wr_slab = jnp.concatenate([wr_uu, wr_up, wr_ur], axis=1)              # (HID, 3*HID)
    wlr = pad_cols(jnp.concatenate([wl_slab, wr_slab], axis=0), CONV_PAD)  # (2*HID, 256)
    bconv = pad_cols(jnp.concatenate([bl_uu, bl_up, bl_ur], axis=1), CONV_PAD)  # (1, 256)

    # classifier slabs, 128-lane padded end-to-end
    w1p = pad_cols(w1, CLF_PAD)                                           # (HID, 128)
    w2p = pad_cols(pad_rows(w2, CLF_PAD), CLF_PAD)                        # (128, 128)
    wclf = jnp.concatenate([w1p, w2p], axis=0)                            # (HID+128, 128)
    bclf = jnp.concatenate([pad_cols(b1, CLF_PAD), pad_cols(b2, CLF_PAD)], axis=0)  # (2, 128)

    # bf16 matmul operands (MXU-native, half the DMA bytes); biases stay f32.
    bf16 = jnp.bfloat16
    inputs = (xin.astype(bf16), win.astype(bf16), adj.astype(bf16),
              wlr.astype(bf16), bconv, wclf.astype(bf16), bclf)

    logits, (emb_u, emb_p, emb_r) = graphsage_forward(
        inputs, n_user=N_USER, n_pc=N_PC, n_url=N_URL, hid=HID, out_dim=OUT)
    logits = jax.block_until_ready(logits)
    emb_u = jax.block_until_ready(emb_u)

    # --- validation: classifier output AND all three conv paths ---
    ref_logits, ref_yu, ref_yp, ref_yr = reference_forward(
        x_user, x_pc, x_url, adj_uu, adj_upc, adj_uurl, raw)

    tol = dict(rtol=3e-2, atol=3e-2)
    assert logits.shape == (N_USER, OUT), logits.shape
    assert bool(jnp.all(jnp.isfinite(logits)))
    assert bool(jnp.allclose(logits, ref_logits, **tol))
    assert bool(jnp.allclose(emb_u, ref_yu, **tol))
    assert bool(jnp.allclose(emb_p, ref_yp, **tol))
    assert bool(jnp.allclose(emb_r, ref_yr, **tol))

    print("KERNEL_OK")
</pallas_src>

<mosaic_0001>
module attributes {stable_mosaic.version = 11 : i64} {
  func.func @_fused_graphsage_kernel(%arg0: i32, %arg1: memref<32x24xbf16, #tpu.memory_space<vmem>>, %arg2: memref<24x64xbf16, #tpu.memory_space<vmem>>, %arg3: memref<32x16xbf16, #tpu.memory_space<vmem>>, %arg4: memref<128x256xbf16, #tpu.memory_space<vmem>>, %arg5: memref<1x256xf32, #tpu.memory_space<vmem>>, %arg6: memref<192x128xbf16, #tpu.memory_space<vmem>>, %arg7: memref<2x128xf32, #tpu.memory_space<vmem>>, %arg8: memref<16x128xf32, #tpu.memory_space<vmem>>, %arg9: memref<32x256xf32, #tpu.memory_space<vmem>>) attributes {dimension_semantics = [#tpu.dimension_semantics<arbitrary>], iteration_bounds = array<i64: 1>, scalar_prefetch = 0 : i64, scratch_operands = 0 : i64, tpu.core_type = #tpu.core_type<tc>, window_params = [{pipeline_mode = #tpu.pipeline_mode<synchronous>, transform_indices = @transform_0, window_bounds = array<i64: 32, 24>}, {pipeline_mode = #tpu.pipeline_mode<synchronous>, transform_indices = @transform_1, window_bounds = array<i64: 24, 64>}, {pipeline_mode = #tpu.pipeline_mode<synchronous>, transform_indices = @transform_2, window_bounds = array<i64: 32, 16>}, {pipeline_mode = #tpu.pipeline_mode<synchronous>, transform_indices = @transform_3, window_bounds = array<i64: 128, 256>}, {pipeline_mode = #tpu.pipeline_mode<synchronous>, transform_indices = @transform_4, window_bounds = array<i64: 1, 256>}, {pipeline_mode = #tpu.pipeline_mode<synchronous>, transform_indices = @transform_5, window_bounds = array<i64: 192, 128>}, {pipeline_mode = #tpu.pipeline_mode<synchronous>, transform_indices = @transform_6, window_bounds = array<i64: 2, 128>}, {pipeline_mode = #tpu.pipeline_mode<synchronous>, transform_indices = @transform_7, window_bounds = array<i64: 16, 128>}, {pipeline_mode = #tpu.pipeline_mode<synchronous>, transform_indices = @transform_8, window_bounds = array<i64: 32, 256>}]} {
    %c0 = arith.constant 0 : index
    %c0_0 = arith.constant 0 : index
    %0 = vector.load %arg1[%c0, %c0_0] : memref<32x24xbf16, #tpu.memory_space<vmem>>, vector<32x24xbf16>
    %c0_1 = arith.constant 0 : index
    %c0_2 = arith.constant 0 : index
    %1 = vector.load %arg2[%c0_1, %c0_2] : memref<24x64xbf16, #tpu.memory_space<vmem>>, vector<24x64xbf16>
    %cst = arith.constant dense<0.000000e+00> : vector<32x64xf32>
    %2 = tpu.matmul %0, %1, %cst {dimension_numbers = #tpu.dot_dimension_numbers<[1], [0], [0], [1], [0, 0, 1, 1], [], []>} : vector<32x24xbf16>, vector<24x64xbf16>, vector<32x64xf32> -> vector<32x64xf32>
    %3 = arith.truncf %2 : vector<32x64xf32> to vector<32x64xbf16>
    %c0_3 = arith.constant 0 : index
    %c0_4 = arith.constant 0 : index
    %4 = vector.load %arg3[%c0_3, %c0_4] : memref<32x16xbf16, #tpu.memory_space<vmem>>, vector<32x16xbf16>
    %5 = vector.extract_strided_slice %3 {offsets = [0, 0], sizes = [16, 64], strides = [1, 1]} : vector<32x64xbf16> to vector<16x64xbf16>
    %cst_5 = arith.constant dense<0.000000e+00> : vector<32x64xf32>
    %6 = tpu.matmul %4, %5, %cst_5 {dimension_numbers = #tpu.dot_dimension_numbers<[1], [0], [0], [1], [0, 0, 1, 1], [], []>} : vector<32x16xbf16>, vector<16x64xbf16>, vector<32x64xf32> -> vector<32x64xf32>
    %7 = arith.truncf %6 : vector<32x64xf32> to vector<32x64xbf16>
    %c0_6 = arith.constant 0 : index
    %c0_7 = arith.constant 0 : index
    %8 = vector.load %arg4[%c0_6, %c0_7] : memref<128x256xbf16, #tpu.memory_space<vmem>>, vector<64x256xbf16>
    %cst_8 = arith.constant dense<0.000000e+00> : vector<32x256xf32>
    %9 = tpu.matmul %7, %8, %cst_8 {dimension_numbers = #tpu.dot_dimension_numbers<[1], [0], [0], [1], [0, 0, 1, 1], [], []>} : vector<32x64xbf16>, vector<64x256xbf16>, vector<32x256xf32> -> vector<32x256xf32>
    %c64 = arith.constant 64 : index
    %c0_9 = arith.constant 0 : index
    %10 = vector.load %arg4[%c64, %c0_9] : memref<128x256xbf16, #tpu.memory_space<vmem>>, vector<64x256xbf16>
    %cst_10 = arith.constant dense<0.000000e+00> : vector<32x256xf32>
    %11 = tpu.matmul %3, %10, %cst_10 {dimension_numbers = #tpu.dot_dimension_numbers<[1], [0], [0], [1], [0, 0, 1, 1], [], []>} : vector<32x64xbf16>, vector<64x256xbf16>, vector<32x256xf32> -> vector<32x256xf32>
    %12 = arith.addf %9, %11 : vector<32x256xf32>
    %c0_11 = arith.constant 0 : index
    %c0_12 = arith.constant 0 : index
    %13 = vector.load %arg5[%c0_11, %c0_12] : memref<1x256xf32, #tpu.memory_space<vmem>>, vector<1x256xf32>
    %14 = vector.broadcast %13 : vector<1x256xf32> to vector<32x256xf32>
    %15 = arith.addf %12, %14 : vector<32x256xf32>
    %c0_13 = arith.constant 0 : index
    %c0_14 = arith.constant 0 : index
    %16 = vector.load %arg9[%c0_13, %c0_14] : memref<32x256xf32, #tpu.memory_space<vmem>>, vector<32x256xf32>
    tpu.vector_store %arg9[%c0_13, %c0_14], %15 {strides = array<i32>} : memref<32x256xf32, #tpu.memory_space<vmem>>, vector<32x256xf32>,
    %17 = vector.extract_strided_slice %15 {offsets = [0, 0], sizes = [16, 64], strides = [1, 1]} : vector<32x256xf32> to vector<16x64xf32>
    %18 = arith.truncf %17 : vector<16x64xf32> to vector<16x64xbf16>
    %c0_15 = arith.constant 0 : index
    %c0_16 = arith.constant 0 : index
    %19 = vector.load %arg6[%c0_15, %c0_16] : memref<192x128xbf16, #tpu.memory_space<vmem>>, vector<64x128xbf16>
    %cst_17 = arith.constant dense<0.000000e+00> : vector<16x128xf32>
    %20 = tpu.matmul %18, %19, %cst_17 {dimension_numbers = #tpu.dot_dimension_numbers<[1], [0], [0], [1], [0, 0, 1, 1], [], []>} : vector<16x64xbf16>, vector<64x128xbf16>, vector<16x128xf32> -> vector<16x128xf32>
    %c0_18 = arith.constant 0 : index
    %c0_19 = arith.constant 0 : index
    %21 = vector.load %arg7[%c0_18, %c0_19] : memref<2x128xf32, #tpu.memory_space<vmem>>, vector<1x128xf32>
    %22 = vector.broadcast %21 : vector<1x128xf32> to vector<16x128xf32>
    %23 = arith.addf %20, %22 : vector<16x128xf32>
    %cst_20 = arith.constant 0.000000e+00 : f32
    %24 = vector.broadcast %cst_20 : f32 to vector<16x128xf32>
    %25 = arith.maximumf %23, %24 : vector<16x128xf32>
    %26 = arith.truncf %25 : vector<16x128xf32> to vector<16x128xbf16>
    %c64_21 = arith.constant 64 : index
    %c0_22 = arith.constant 0 : index
    %27 = vector.load %arg6[%c64_21, %c0_22] : memref<192x128xbf16, #tpu.memory_space<vmem>>, vector<128x128xbf16>
    %cst_23 = arith.constant dense<0.000000e+00> : vector<16x128xf32>
    %28 = tpu.matmul %26, %27, %cst_23 {dimension_numbers = #tpu.dot_dimension_numbers<[1], [0], [0], [1], [0, 0, 1, 1], [], []>} : vector<16x128xbf16>, vector<128x128xbf16>, vector<16x128xf32> -> vector<16x128xf32>
    %c1 = arith.constant 1 : index
    %c0_24 = arith.constant 0 : index
    %29 = vector.load %arg7[%c1, %c0_24] : memref<2x128xf32, #tpu.memory_space<vmem>>, vector<1x128xf32>
    %30 = vector.broadcast %29 : vector<1x128xf32> to vector<16x128xf32>
    %31 = arith.addf %28, %30 : vector<16x128xf32>
    %c0_25 = arith.constant 0 : index
    %c0_26 = arith.constant 0 : index
    %32 = vector.load %arg8[%c0_25, %c0_26] : memref<16x128xf32, #tpu.memory_space<vmem>>, vector<16x128xf32>
    tpu.vector_store %arg8[%c0_25, %c0_26], %31 {strides = array<i32>} : memref<16x128xf32, #tpu.memory_space<vmem>>, vector<16x128xf32>,
    return
  }
  func.func @transform_0(%arg0: i32) -> (i32, i32) {
    %c0_i32 = arith.constant 0 : i32
    %c0_i32_0 = arith.constant 0 : i32
    %c0_i32_1 = arith.constant 0 : i32
    return %c0_i32, %c0_i32_0 : i32, i32
  }
  func.func @transform_1(%arg0: i32) -> (i32, i32) {
    %c0_i32 = arith.constant 0 : i32
    %c0_i32_0 = arith.constant 0 : i32
    %c0_i32_1 = arith.constant 0 : i32
    return %c0_i32, %c0_i32_0 : i32, i32
  }
  func.func @transform_2(%arg0: i32) -> (i32, i32) {
    %c0_i32 = arith.constant 0 : i32
    %c0_i32_0 = arith.constant 0 : i32
    %c0_i32_1 = arith.constant 0 : i32
    return %c0_i32, %c0_i32_0 : i32, i32
  }
  func.func @transform_3(%arg0: i32) -> (i32, i32) {
    %c0_i32 = arith.constant 0 : i32
    %c0_i32_0 = arith.constant 0 : i32
    %c0_i32_1 = arith.constant 0 : i32
    return %c0_i32, %c0_i32_0 : i32, i32
  }
  func.func @transform_4(%arg0: i32) -> (i32, i32) {
    %c0_i32 = arith.constant 0 : i32
    %c0_i32_0 = arith.constant 0 : i32
    %c0_i32_1 = arith.constant 0 : i32
    return %c0_i32, %c0_i32_0 : i32, i32
  }
  func.func @transform_5(%arg0: i32) -> (i32, i32) {
    %c0_i32 = arith.constant 0 : i32
    %c0_i32_0 = arith.constant 0 : i32
    %c0_i32_1 = arith.constant 0 : i32
    return %c0_i32, %c0_i32_0 : i32, i32
  }
  func.func @transform_6(%arg0: i32) -> (i32, i32) {
    %c0_i32 = arith.constant 0 : i32
    %c0_i32_0 = arith.constant 0 : i32
    %c0_i32_1 = arith.constant 0 : i32
    return %c0_i32, %c0_i32_0 : i32, i32
  }
  func.func @transform_7(%arg0: i32) -> (i32, i32) {
    %c0_i32 = arith.constant 0 : i32
    %c0_i32_0 = arith.constant 0 : i32
    %c0_i32_1 = arith.constant 0 : i32
    return %c0_i32, %c0_i32_0 : i32, i32
  }
  func.func @transform_8(%arg0: i32) -> (i32, i32) {
    %c0_i32 = arith.constant 0 : i32
    %c0_i32_0 = arith.constant 0 : i32
    %c0_i32_1 = arith.constant 0 : i32
    return %c0_i32, %c0_i32_0 : i32, i32
  }
}

</mosaic_0001>

<llo_original>
// kernel: tpu_custom_call.1
$region0: #{tpu_custom_call.1}
  #allocation0 [shape = 'u32[]', space=smem, size = 0x4, offset = 0x4, fixed_abs, tag = 'smem constant byte address 0x4 - core index']
  #allocation1 [shape = 'u32[144,128]{1,0:T(1,128)}', space=vmem, size = 0x12000, scoped, tag = 'internal scratch']
  %s0 = inlined_call_operand.vmem [shape: bf16[32,24], index: 0, kind: input, shape index: {}]
  %s1 = inlined_call_operand.vmem [shape: bf16[24,64], index: 1, kind: input, shape index: {}]
  %s2 = inlined_call_operand.vmem [shape: bf16[32,16], index: 2, kind: input, shape index: {}]
  %s3 = inlined_call_operand.hbm [shape: bf16[128,256], index: 3, kind: input, shape index: {}]
  %s4 = inlined_call_operand.vmem [shape: f32[1,256], index: 4, kind: input, shape index: {}]
  %s5 = inlined_call_operand.hbm [shape: bf16[192,128], index: 5, kind: input, shape index: {}]
  %s6 = inlined_call_operand.vmem [shape: f32[2,128], index: 6, kind: input, shape index: {}]
  %s7 = inlined_call_operand.hbm [shape: f32[16,128], index: 7, kind: output, shape index: {0}]
  %s8 = inlined_call_operand.hbm [shape: f32[32,256], index: 8, kind: output, shape index: {1}]
  %9 = xla_tuple %s7, %s8
  %s10 = sld [smem:[#allocation0]]
  $region54: #{tpu_custom_call.1} parent=0
    _
  %s12 = ssub.s32 1, %s10
  %s13 = scalar_select 0, %s12, %s10
  $region1: #{tpu_custom_call.1} parent=0
    #allocation2 [shape = 'u8[65536]{0}', space=vmem, size = 0x10000, scoped, tag = 'input window, operand 3, single buffered']
    #allocation3 [shape = 's32[1]{0}', space=sflag, size = 0x4, scoped, tag = 'scoped memory for tpu_custom_call.1']
    #allocation4 [shape = 's32[1]{0}', space=sflag, size = 0x4, scoped, tag = 'scoped memory for tpu_custom_call.1']
    #allocation5 [shape = 'u8[49152]{0}', space=vmem, size = 0xc000, scoped, tag = 'input window, operand 5, single buffered']
    #allocation6 [shape = 's32[1]{0}', space=sflag, size = 0x4, scoped, tag = 'scoped memory for tpu_custom_call.1']
    #allocation7 [shape = 'u8[8192]{0}', space=vmem, size = 0x2000, scoped, tag = 'output window, operand 0, single buffered']
    #allocation8 [shape = 'u8[32768]{0}', space=vmem, size = 0x8000, scoped, tag = 'output window, operand 1, single buffered']
    #allocation9 [shape = 's32[1]{0}', space=sflag, size = 0x4, scoped, tag = 'scoped memory for tpu_custom_call.1']
    %14 = vsyncpa [#allocation3], 0
    %15 = vsyncpa [#allocation6], 0
    %16 = vsyncpa [#allocation4], 0
    %17 = vsyncpa [#allocation9], 0
    // Predicated region
    $region2: #{tpu_custom_call.1} parent=1 // pred_check
      _
    $region3: #{tpu_custom_call.1} parent=1 // pred_check_branch
      %19 = sbr.rel (0) target = $region5
    $region4: #{tpu_custom_call.1} parent=1 // pred_region
      _
    $region5: #{tpu_custom_call.1} parent=1 // pred_fallthru
      _
    // Predicated region
    $region6: #{tpu_custom_call.1} parent=1 // pred_check
      _
    $region7: #{tpu_custom_call.1} parent=1 // pred_check_branch
      %21 = sbr.rel (0) target = $region9
    $region8: #{tpu_custom_call.1} parent=1 // pred_region
      _
    $region9: #{tpu_custom_call.1} parent=1 // pred_fallthru
      _
    // Predicated region
    $region10: #{tpu_custom_call.1} parent=1 // pred_check
      _
    $region11: #{tpu_custom_call.1} parent=1 // pred_check_branch
      %23 = sbr.rel (0) target = $region13
    $region12: #{tpu_custom_call.1} parent=1 // pred_region
      _
    $region13: #{tpu_custom_call.1} parent=1 // pred_fallthru
      _
    // Predicated region
    $region14: #{tpu_custom_call.1} parent=1 // pred_check
      _
    $region15: #{tpu_custom_call.1} parent=1 // pred_check_branch
      %25 = sbr.rel (0) target = $region17
    $region16: #{tpu_custom_call.1} parent=1 // pred_region
      %s27 = ssub.s32 2048, 2048
      %28 = vsyncadd [#allocation3], %s27
      %s29 = sshll.u32 [#allocation2], 4
      %s30 = int_to_ptr.vmem [resolvable:$true] %s29
      %35 = dma.hbm_to_vmem [thread:$0]  %s3, 2048, %s30, [#allocation3], 128, 128, 8
    $region17: #{tpu_custom_call.1} parent=1 // pred_fallthru
      _
    // Predicated region
    $region18: #{tpu_custom_call.1} parent=1 // pred_check
      _
    $region19: #{tpu_custom_call.1} parent=1 // pred_check_branch
      %37 = sbr.rel (0) target = $region21
    $region20: #{tpu_custom_call.1} parent=1 // pred_region
      _
    $region21: #{tpu_custom_call.1} parent=1 // pred_fallthru
      _
    // Predicated region
    $region22: #{tpu_custom_call.1} parent=1 // pred_check
      _
    $region23: #{tpu_custom_call.1} parent=1 // pred_check_branch
      %39 = sbr.rel (0) target = $region25
    $region24: #{tpu_custom_call.1} parent=1 // pred_region
      %s41 = ssub.s32 1536, 1536
      %42 = vsyncadd [#allocation6], %s41
      %s43 = sshll.u32 [#allocation5], 4
      %s44 = int_to_ptr.vmem [resolvable:$true] %s43
      %49 = dma.hbm_to_vmem [thread:$0]  %s5, 1536, %s44, [#allocation6], 64, 64, 4
    $region25: #{tpu_custom_call.1} parent=1 // pred_fallthru
      _
    // Predicated region
    $region26: #{tpu_custom_call.1} parent=1 // pred_check
      _
    $region27: #{tpu_custom_call.1} parent=1 // pred_check_branch
      %51 = sbr.rel (0) target = $region29
    $region28: #{tpu_custom_call.1} parent=1 // pred_region
      _
    $region29: #{tpu_custom_call.1} parent=1 // pred_fallthru
      _
    // Predicated region
    $region30: #{tpu_custom_call.1} parent=1 // pred_check
      _
    $region31: #{tpu_custom_call.1} parent=1 // pred_check_branch
      %53 = sbr.rel (0) target = $region33
    $region32: #{tpu_custom_call.1} parent=1 // pred_region
      %54 = dma.done [#allocation3], 2048
    $region33: #{tpu_custom_call.1} parent=1 // pred_fallthru
      _
    // Predicated region
    $region34: #{tpu_custom_call.1} parent=1 // pred_check
      _
    $region35: #{tpu_custom_call.1} parent=1 // pred_check_branch
      %56 = sbr.rel (0) target = $region37
    $region36: #{tpu_custom_call.1} parent=1 // pred_region
      %57 = dma.done [#allocation6], 1536
    $region37: #{tpu_custom_call.1} parent=1 // pred_fallthru
      _
    %v59 = vld [vmem:[%s0] sm:$0xf]
    %v60 = vld [vmem:[%s0 + $0x4] sm:$0xf]
    %v61 = vld [vmem:[%s0 + $0x8] sm:$0xf]
    %v62 = vld [vmem:[%s0 + $0xc] sm:$0xf]
    %v63 = vld [vmem:[%s1] sm:$0xf]
    %v64 = vld [vmem:[%s1 + $0x4] sm:$0xf]
    %v65 = vld [vmem:[%s1 + $0x8] sm:$0xf]
    %v70 = vunpack.c.l.b16 %v59
    %v71 = vunpack.c.l.b16 %v60
    %v72 = vunpack.c.l.b16 %v61
    %v73 = vunpack.c.l.b16 %v62
    %v74 = vpack.c.b16 %v71, %v70
    %v75 = vpack.c.b16 %v73, %v72
    %v79 = vunpack.c.l.b16 %v63
    %v80 = vunpack.c.l.b16 %v64
    %v81 = vunpack.c.l.b16 %v65
    %v82 = vpack.c.b16 %v80, %v79
    %v83 = vpack.c.b16 %v81, %v81
    %vm85 = vcmask 195584
    %v87 = vsel %vm85, %v74, 0
    %v90 = vsel %vm85, %v75, 0
    %vm92 = vcmask 1043456
    %v94 = vsel %vm92, %v83, 0
    %96 = vmatprep.subr.bf16.mxu0 0
    %97 = vmatpush1.bf16.msra.mxu0 %v82
    %98 = vmatprep.subr.bf16.mxu0 0
    %99 = vmatpush1.bf16.msra.mxu0 %v94
    %100 = vmatprep.subr.bf16.mxu0 0
    %101 = vmatpush1.bf16.msra.mxu0 0
    %102 = vmatprep.subr.bf16.mxu0 0
    %103 = vmatpush1.bf16.msra.mxu0 0
    %104 = vmatprep.subr.bf16.mxu0 0
    %105 = vmatpush1.bf16.msra.mxu0 0
    %106 = vmatprep.subr.bf16.mxu0 0
    %107 = vmatpush1.bf16.msra.mxu0 0
    %108 = vmatprep.subr.bf16.mxu0 0
    %109 = vmatpush1.bf16.msra.mxu0 0
    %110 = vmatprep.subr.bf16.mxu0 0
    %111 = vmatpush1.bf16.msra.mxu0 0
    %112 = vmatprep.subr.bf16.mxu0 0
    %113 = vmatpush1.bf16.msra.mxu0 0
    %114 = vmatprep.subr.bf16.mxu0 0
    %115 = vmatpush1.bf16.msra.mxu0 0
    %116 = vmatprep.subr.bf16.mxu0 0
    %117 = vmatpush1.bf16.msra.mxu0 0
    %118 = vmatprep.subr.bf16.mxu0 0
    %119 = vmatpush1.bf16.msra.mxu0 0
    %120 = vmatprep.subr.bf16.mxu0 0
    %121 = vmatpush1.bf16.msra.mxu0 0
    %122 = vmatprep.subr.bf16.mxu0 0
    %123 = vmatpush1.bf16.msra.mxu0 0
    %124 = vmatprep.subr.bf16.mxu0 0
    %125 = vmatpush1.bf16.msra.mxu0 0
    %126 = vmatprep.subr.bf16.mxu0 0
    %127 = vmatpush1.bf16.msra.mxu0 0
    %128 = vmatprep.mubr.bf16.mxu0 0
    %129 = vmatmul.mubr.bf16.gmra.mrb[0].mxu0 %v87
    %v130 = vpop.f32.mrb[0].mxu0
    %v131 = vadd.f32 0.0, %v130
    %v132 = vpop.f32.mrb[0].mxu0
    %v133 = vpop.f32.mrb[0].mxu0
    %v134 = vadd.f32 0.0, %v133
    %v135 = vpop.f32.mrb[0].mxu0
    %136 = vmatprep.mubr.bf16.mxu0 0
    %137 = vmatmul.mubr.bf16.gmra.mrb[0].mxu0 %v90
    %v138 = vpop.f32.mrb[0].mxu0
    %v139 = vadd.f32 0.0, %v138
    %v140 = vpop.f32.mrb[0].mxu0
    %v141 = vpop.f32.mrb[0].mxu0
    %v142 = vadd.f32 0.0, %v141
    %v143 = vpop.f32.mrb[0].mxu0
    %144 = vdwg.mxu0
    %v145 = vpack.c.bf16 %v134, %v131
    %v146 = vpack.c.bf16 %v142, %v139
    %v147 = vld [vmem:[%s2] sm:$0xf]
    %v148 = vld [vmem:[%s2 + $0x4] sm:$0xf]
    %v149 = vld [vmem:[%s2 + $0x8] sm:$0xf]
    %v150 = vld [vmem:[%s2 + $0xc] sm:$0xf]
    %v155 = vunpack.c.l.b16 %v147
    %v156 = vunpack.c.l.b16 %v148
    %v157 = vunpack.c.l.b16 %v149
    %v158 = vunpack.c.l.b16 %v150
    %v159 = vpack.c.b16 %v156, %v155
    %v160 = vpack.c.b16 %v158, %v157
    %vm161 = vcmask 130048
    %v163 = vsel %vm161, %v159, 0
    %v166 = vsel %vm161, %v160, 0
    %168 = vmatprep.subr.bf16.mxu0 0
    %169 = vmatpush1.bf16.msra.mxu0 %v145
    %170 = vmatprep.subr.bf16.mxu0 0
    %171 = vmatpush1.bf16.msra.mxu0 0
    %172 = vmatprep.subr.bf16.mxu0 0
    %173 = vmatpush1.bf16.msra.mxu0 0
    %174 = vmatprep.subr.bf16.mxu0 0
    %175 = vmatpush1.bf16.msra.mxu0 0
    %176 = vmatprep.subr.bf16.mxu0 0
    %177 = vmatpush1.bf16.msra.mxu0 0
    %178 = vmatprep.subr.bf16.mxu0 0
    %179 = vmatpush1.bf16.msra.mxu0 0
    %180 = vmatprep.subr.bf16.mxu0 0
    %181 = vmatpush1.bf16.msra.mxu0 0
    %182 = vmatprep.subr.bf16.mxu0 0
    %183 = vmatpush1.bf16.msra.mxu0 0
    %184 = vmatprep.subr.bf16.mxu0 0
    %185 = vmatpush1.bf16.msra.mxu0 0
    %186 = vmatprep.subr.bf16.mxu0 0
    %187 = vmatpush1.bf16.msra.mxu0 0
    %188 = vmatprep.subr.bf16.mxu0 0
    %189 = vmatpush1.bf16.msra.mxu0 0
    %190 = vmatprep.subr.bf16.mxu0 0
    %191 = vmatpush1.bf16.msra.mxu0 0
    %192 = vmatprep.subr.bf16.mxu0 0
    %193 = vmatpush1.bf16.msra.mxu0 0
    %194 = vmatprep.subr.bf16.mxu0 0
    %195 = vmatpush1.bf16.msra.mxu0 0
    %196 = vmatprep.subr.bf16.mxu0 0
    %197 = vmatpush1.bf16.msra.mxu0 0
    %198 = vmatprep.subr.bf16.mxu0 0
    %199 = vmatpush1.bf16.msra.mxu0 0
    %200 = vmatprep.mubr.bf16.mxu0 0
    %201 = vmatmul.mubr.bf16.gmra.mrb[0].mxu0 %v163
    %v202 = vpop.f32.mrb[0].mxu0
    %v203 = vadd.f32 0.0, %v202
    %v204 = vpop.f32.mrb[0].mxu0
    %v205 = vpop.f32.mrb[0].mxu0
    %v206 = vadd.f32 0.0, %v205
    %v207 = vpop.f32.mrb[0].mxu0
    %208 = vmatprep.mubr.bf16.mxu0 0
    %209 = vmatmul.mubr.bf16.gmra.mrb[0].mxu0 %v166
    %v210 = vpop.f32.mrb[0].mxu0
    %v211 = vadd.f32 0.0, %v210
    %v212 = vpop.f32.mrb[0].mxu0
    %v213 = vpop.f32.mrb[0].mxu0
    %v214 = vadd.f32 0.0, %v213
    %v215 = vpop.f32.mrb[0].mxu0
    %216 = vdwg.mxu0
    %v217 = vpack.c.bf16 %v206, %v203
    %v218 = vpack.c.bf16 %v214, %v211
    %v219 = vld [vmem:[#allocation2] sm:$0xff]
    %v220 = vld [vmem:[#allocation2 + $0x8] sm:$0xff]
    %v221 = vld [vmem:[#allocation2 + $0x10] sm:$0xff]
    %v222 = vld [vmem:[#allocation2 + $0x18] sm:$0xff]
    %v223 = vld [vmem:[#allocation2 + $0x20] sm:$0xff]
    %v224 = vld [vmem:[#allocation2 + $0x28] sm:$0xff]
    %v225 = vld [vmem:[#allocation2 + $0x30] sm:$0xff]
    %v226 = vld [vmem:[#allocation2 + $0x38] sm:$0xff]
    %v227 = vld [vmem:[#allocation2 + $0x40] sm:$0xff]
    %v228 = vld [vmem:[#allocation2 + $0x48] sm:$0xff]
    %v229 = vld [vmem:[#allocation2 + $0x50] sm:$0xff]
    %v230 = vld [vmem:[#allocation2 + $0x58] sm:$0xff]
    %v231 = vld [vmem:[#allocation2 + $0x60] sm:$0xff]
    %v232 = vld [vmem:[#allocation2 + $0x68] sm:$0xff]
    %v233 = vld [vmem:[#allocation2 + $0x70] sm:$0xff]
    %v234 = vld [vmem:[#allocation2 + $0x78] sm:$0xff]
    %v243 = vunpack.c.l.b16 %v227
    %v244 = vunpack.c.h.b16 %v227
    %v245 = vunpack.c.l.b16 %v228
    %v246 = vunpack.c.h.b16 %v228
    %v247 = vunpack.c.l.b16 %v229
    %v248 = vunpack.c.h.b16 %v229
    %v249 = vunpack.c.l.b16 %v230
    %v250 = vunpack.c.h.b16 %v230
    %v251 = vunpack.c.l.b16 %v231
    %v252 = vunpack.c.h.b16 %v231
    %v253 = vunpack.c.l.b16 %v232
    %v254 = vunpack.c.h.b16 %v232
    %v255 = vunpack.c.l.b16 %v233
    %v256 = vunpack.c.h.b16 %v233
    %v257 = vunpack.c.l.b16 %v234
    %v258 = vunpack.c.h.b16 %v234
    %v259 = vpack.c.b16 %v245, %v243
    %v260 = vpack.c.b16 %v246, %v244
    %v261 = vpack.c.b16 %v249, %v247
    %v262 = vpack.c.b16 %v250, %v248
    %v263 = vpack.c.b16 %v253, %v251
    %v264 = vpack.c.b16 %v254, %v252
    %v265 = vpack.c.b16 %v257, %v255
    %v266 = vpack.c.b16 %v258, %v256
    %vm275 = vcmask 523264
    %v277 = vsel %vm275, %v145, 0
    %v280 = vsel %vm275, %v146, 0
    %282 = vmatprep.subr.bf16.mxu0 %v260
    %283 = vmatpush1.bf16.msra.mxu0 %v259
    %284 = vmatprep.subr.bf16.mxu0 %v262
    %285 = vmatpush1.bf16.msra.mxu0 %v261
    %286 = vmatprep.subr.bf16.mxu0 %v264
    %287 = vmatpush1.bf16.msra.mxu0 %v263
    %288 = vmatprep.subr.bf16.mxu0 %v266
    %289 = vmatpush1.bf16.msra.mxu0 %v265
    %290 = vmatprep.subr.bf16.mxu0 0
    %291 = vmatpush1.bf16.msra.mxu0 0
    %292 = vmatprep.subr.bf16.mxu0 0
    %293 = vmatpush1.bf16.msra.mxu0 0
    %294 = vmatprep.subr.bf16.mxu0 0
    %295 = vmatpush1.bf16.msra.mxu0 0
    %296 = vmatprep.subr.bf16.mxu0 0
    %297 = vmatpush1.bf16.msra.mxu0 0
    %298 = vmatprep.subr.bf16.mxu0 0
    %299 = vmatpush1.bf16.msra.mxu0 0
    %300 = vmatprep.subr.bf16.mxu0 0
    %301 = vmatpush1.bf16.msra.mxu0 0
    %302 = vmatprep.subr.bf16.mxu0 0
    %303 = vmatpush1.bf16.msra.mxu0 0
    %304 = vmatprep.subr.bf16.mxu0 0
    %305 = vmatpush1.bf16.msra.mxu0 0
    %306 = vmatprep.subr.bf16.mxu0 0
    %307 = vmatpush1.bf16.msra.mxu0 0
    %308 = vmatprep.subr.bf16.mxu0 0
    %309 = vmatpush1.bf16.msra.mxu0 0
    %310 = vmatprep.subr.bf16.mxu0 0
    %311 = vmatpush1.bf16.msra.mxu0 0
    %312 = vmatprep.subr.bf16.mxu0 0
    %313 = vmatpush1.bf16.msra.mxu0 0
    %314 = vmatprep.mubr.bf16.mxu0 0
    %315 = vmatmul.mubr.bf16.gmra.mrb[0].mxu0 %v277
    %v316 = vpop.f32.mrb[0].mxu0
    %v317 = vadd.f32 0.0, %v316
    %v318 = vpop.f32.mrb[0].mxu0
    %v319 = vadd.f32 0.0, %v318
    %v320 = vpop.f32.mrb[0].mxu0
    %v321 = vadd.f32 0.0, %v320
    %v322 = vpop.f32.mrb[0].mxu0
    %v323 = vadd.f32 0.0, %v322
    %324 = vmatprep.mubr.bf16.mxu0 0
    %325 = vmatmul.mubr.bf16.gmra.mrb[0].mxu0 %v280
    %v326 = vpop.f32.mrb[0].mxu0
    %v327 = vadd.f32 0.0, %v326
    %v328 = vpop.f32.mrb[0].mxu0
    %v329 = vadd.f32 0.0, %v328
    %v330 = vpop.f32.mrb[0].mxu0
    %v331 = vadd.f32 0.0, %v330
    %v332 = vpop.f32.mrb[0].mxu0
    %v333 = vadd.f32 0.0, %v332
    %334 = vdwg.mxu0
    %v343 = vunpack.c.l.b16 %v219
    %v344 = vunpack.c.h.b16 %v219
    %v345 = vunpack.c.l.b16 %v220
    %v346 = vunpack.c.h.b16 %v220
    %v347 = vunpack.c.l.b16 %v221
    %v348 = vunpack.c.h.b16 %v221
    %v349 = vunpack.c.l.b16 %v222
    %v350 = vunpack.c.h.b16 %v222
    %v351 = vunpack.c.l.b16 %v223
    %v352 = vunpack.c.h.b16 %v223
    %v353 = vunpack.c.l.b16 %v224
    %v354 = vunpack.c.h.b16 %v224
    %v355 = vunpack.c.l.b16 %v225
    %v356 = vunpack.c.h.b16 %v225
    %v357 = vunpack.c.l.b16 %v226
    %v358 = vunpack.c.h.b16 %v226
    %v359 = vpack.c.b16 %v345, %v343
    %v360 = vpack.c.b16 %v346, %v344
    %v361 = vpack.c.b16 %v349, %v347
    %v362 = vpack.c.b16 %v350, %v348
    %v363 = vpack.c.b16 %v353, %v351
    %v364 = vpack.c.b16 %v354, %v352
    %v365 = vpack.c.b16 %v357, %v355
    %v366 = vpack.c.b16 %v358, %v356
    %v376 = vsel %vm275, %v217, 0
    %v379 = vsel %vm275, %v218, 0
    %381 = vmatprep.subr.bf16.mxu0 %v360
    %382 = vmatpush1.bf16.msra.mxu0 %v359
    %383 = vmatprep.subr.bf16.mxu0 %v362
    %384 = vmatpush1.bf16.msra.mxu0 %v361
    %385 = vmatprep.subr.bf16.mxu0 %v364
    %386 = vmatpush1.bf16.msra.mxu0 %v363
    %387 = vmatprep.subr.bf16.mxu0 %v366
    %388 = vmatpush1.bf16.msra.mxu0 %v365
    %389 = vmatprep.subr.bf16.mxu0 0
    %390 = vmatpush1.bf16.msra.mxu0 0
    %391 = vmatprep.subr.bf16.mxu0 0
    %392 = vmatpush1.bf16.msra.mxu0 0
    %393 = vmatprep.subr.bf16.mxu0 0
    %394 = vmatpush1.bf16.msra.mxu0 0
    %395 = vmatprep.subr.bf16.mxu0 0
    %396 = vmatpush1.bf16.msra.mxu0 0
    %397 = vmatprep.subr.bf16.mxu0 0
    %398 = vmatpush1.bf16.msra.mxu0 0
    %399 = vmatprep.subr.bf16.mxu0 0
    %400 = vmatpush1.bf16.msra.mxu0 0
    %401 = vmatprep.subr.bf16.mxu0 0
    %402 = vmatpush1.bf16.msra.mxu0 0
    %403 = vmatprep.subr.bf16.mxu0 0
    %404 = vmatpush1.bf16.msra.mxu0 0
    %405 = vmatprep.subr.bf16.mxu0 0
    %406 = vmatpush1.bf16.msra.mxu0 0
    %407 = vmatprep.subr.bf16.mxu0 0
    %408 = vmatpush1.bf16.msra.mxu0 0
    %409 = vmatprep.subr.bf16.mxu0 0
    %410 = vmatpush1.bf16.msra.mxu0 0
    %411 = vmatprep.subr.bf16.mxu0 0
    %412 = vmatpush1.bf16.msra.mxu0 0
    %413 = vmatprep.mubr.bf16.mxu0 0
    %414 = vmatmul.mubr.bf16.gmra.mrb[0].mxu0 %v376
    %v415 = vpop.f32.mrb[0].mxu0
    %v416 = vadd.f32 %v317, %v415
    %v417 = vpop.f32.mrb[0].mxu0
    %v418 = vadd.f32 %v319, %v417
    %v419 = vpop.f32.mrb[0].mxu0
    %v420 = vadd.f32 %v321, %v419
    %v421 = vpop.f32.mrb[0].mxu0
    %v422 = vadd.f32 %v323, %v421
    %423 = vmatprep.mubr.bf16.mxu0 0
    %424 = vmatmul.mubr.bf16.gmra.mrb[0].mxu0 %v379
    %v425 = vpop.f32.mrb[0].mxu0
    %v426 = vadd.f32 %v327, %v425
    %v427 = vpop.f32.mrb[0].mxu0
    %v428 = vadd.f32 %v329, %v427
    %v429 = vpop.f32.mrb[0].mxu0
    %v430 = vadd.f32 %v331, %v429
    %v431 = vpop.f32.mrb[0].mxu0
    %v432 = vadd.f32 %v333, %v431
    %433 = vdwg.mxu0
    %v434 = vld [vmem:[%s4] sm:$0x3]
    %v436 = vlaneseq
    %v437 = vshrl.u32 %v436, 7
    %v438 = vsub.s32 0, %v437
    %v439 = vrot.slane %v434, %v438
    %v440 = vlaneseq
    %v441 = vshrl.u32 %v440, 7
    %v442 = vsub.s32 1, %v441
    %v443 = vrot.slane %v434, %v442
    %v446 = vadd.f32 %v416, %v439
    %v447 = vadd.f32 %v418, %v443
    %v448 = vadd.f32 %v420, %v439
    %v449 = vadd.f32 %v422, %v443
    %v450 = vadd.f32 %v426, %v439
    %v451 = vadd.f32 %v428, %v443
    %v452 = vadd.f32 %v430, %v439
    %v453 = vadd.f32 %v432, %v443
    %454 = vst [vmem:[#allocation8] sm:$0xff] %v446
    %455 = vst [vmem:[#allocation8 + $0x8] sm:$0xff] %v447
    %456 = vst [vmem:[#allocation8 + $0x10] sm:$0xff] %v448
    %457 = vst [vmem:[#allocation8 + $0x18] sm:$0xff] %v449
    %458 = vst [vmem:[#allocation8 + $0x20] sm:$0xff] %v450
    %459 = vst [vmem:[#allocation8 + $0x28] sm:$0xff] %v451
    %460 = vst [vmem:[#allocation8 + $0x30] sm:$0xff] %v452
    %461 = vst [vmem:[#allocation8 + $0x38] sm:$0xff] %v453
    %v462 = vpack.c.bf16 %v448, %v446
    %v463 = vld [vmem:[#allocation5] sm:$0xf]
    %v464 = vld [vmem:[#allocation5 + $0x4] sm:$0xf]
    %v465 = vld [vmem:[#allocation5 + $0x8] sm:$0xf]
    %v466 = vld [vmem:[#allocation5 + $0xc] sm:$0xf]
    %v467 = vld [vmem:[#allocation5 + $0x10] sm:$0xf]
    %v468 = vld [vmem:[#allocation5 + $0x14] sm:$0xf]
    %v469 = vld [vmem:[#allocation5 + $0x18] sm:$0xf]
    %v470 = vld [vmem:[#allocation5 + $0x1c] sm:$0xf]
    %v471 = vld [vmem:[%s6] sm:$0x1]
    %v472 = vlaneseq
    %v473 = vshrl.u32 %v472, 7
    %v474 = vsub.s32 0, %v473
    %v475 = vrot.slane %v471, %v474
    %v484 = vunpack.c.l.b16 %v463
    %v485 = vunpack.c.l.b16 %v464
    %v486 = vunpack.c.l.b16 %v465
    %v487 = vunpack.c.l.b16 %v466
    %v488 = vunpack.c.l.b16 %v467
    %v489 = vunpack.c.l.b16 %v468
    %v490 = vunpack.c.l.b16 %v469
    %v491 = vunpack.c.l.b16 %v470
    %v492 = vpack.c.b16 %v485, %v484
    %v493 = vpack.c.b16 %v487, %v486
    %v494 = vpack.c.b16 %v489, %v488
    %v495 = vpack.c.b16 %v491, %v490
    %v501 = vsel %vm275, %v462, 0
    %503 = vmatprep.subr.bf16.mxu0 0
    %504 = vmatpush1.bf16.msra.mxu0 %v492
    %505 = vmatprep.subr.bf16.mxu0 0
    %506 = vmatpush1.bf16.msra.mxu0 %v493
    %507 = vmatprep.subr.bf16.mxu0 0
    %508 = vmatpush1.bf16.msra.mxu0 %v494
    %509 = vmatprep.subr.bf16.mxu0 0
    %510 = vmatpush1.bf16.msra.mxu0 %v495
    %511 = vmatprep.subr.bf16.mxu0 0
    %512 = vmatpush1.bf16.msra.mxu0 0
    %513 = vmatprep.subr.bf16.mxu0 0
    %514 = vmatpush1.bf16.msra.mxu0 0
    %515 = vmatprep.subr.bf16.mxu0 0
    %516 = vmatpush1.bf16.msra.mxu0 0
    %517 = vmatprep.subr.bf16.mxu0 0
    %518 = vmatpush1.bf16.msra.mxu0 0
    %519 = vmatprep.subr.bf16.mxu0 0
    %520 = vmatpush1.bf16.msra.mxu0 0
    %521 = vmatprep.subr.bf16.mxu0 0
    %522 = vmatpush1.bf16.msra.mxu0 0
    %523 = vmatprep.subr.bf16.mxu0 0
    %524 = vmatpush1.bf16.msra.mxu0 0
    %525 = vmatprep.subr.bf16.mxu0 0
    %526 = vmatpush1.bf16.msra.mxu0 0
    %527 = vmatprep.subr.bf16.mxu0 0
    %528 = vmatpush1.bf16.msra.mxu0 0
    %529 = vmatprep.subr.bf16.mxu0 0
    %530 = vmatpush1.bf16.msra.mxu0 0
    %531 = vmatprep.subr.bf16.mxu0 0
    %532 = vmatpush1.bf16.msra.mxu0 0
    %533 = vmatprep.subr.bf16.mxu0 0
    %534 = vmatpush1.bf16.msra.mxu0 0
    %535 = vmatprep.mubr.bf16.mxu0 0
    %536 = vmatmul.mubr.bf16.gmra.mrb[0].mxu0 %v501
    %v537 = vpop.f32.mrb[0].mxu0
    %v538 = vadd.f32 %v475, %v537
    %v539 = vpop.f32.mrb[0].mxu0
    %v540 = vpop.f32.mrb[0].mxu0
    %v541 = vadd.f32 %v475, %v540
    %v542 = vpop.f32.mrb[0].mxu0
    %543 = vdwg.mxu0
    %v544 = vmax.f32 %v538, 0.0
    %v545 = vmax.f32 %v541, 0.0
    %v546 = vpack.c.bf16 %v545, %v544
    %v547 = vld [vmem:[#allocation5 + $0x20] sm:$0xf]
    %v548 = vld [vmem:[#allocation5 + $0x24] sm:$0xf]
    %v549 = vld [vmem:[#allocation5 + $0x28] sm:$0xf]
    %v550 = vld [vmem:[#allocation5 + $0x2c] sm:$0xf]
    %v551 = vld [vmem:[#allocation5 + $0x30] sm:$0xf]
    %v552 = vld [vmem:[#allocation5 + $0x34] sm:$0xf]
    %v553 = vld [vmem:[#allocation5 + $0x38] sm:$0xf]
    %v554 = vld [vmem:[#allocation5 + $0x3c] sm:$0xf]
    %v555 = vld [vmem:[#allocation5 + $0x40] sm:$0xf]
    %v556 = vld [vmem:[#allocation5 + $0x44] sm:$0xf]
    %v557 = vld [vmem:[#allocation5 + $0x48] sm:$0xf]
    %v558 = vld [vmem:[#allocation5 + $0x4c] sm:$0xf]
    %v559 = vld [vmem:[#allocation5 + $0x50] sm:$0xf]
    %v560 = vld [vmem:[#allocation5 + $0x54] sm:$0xf]
    %v561 = vld [vmem:[#allocation5 + $0x58] sm:$0xf]
    %v562 = vld [vmem:[#allocation5 + $0x5c] sm:$0xf]
    %v563 = vld [vmem:[%s6 + $0x1] sm:$0x1]
    %v564 = vlaneseq
    %v565 = vshrl.u32 %v564, 7
    %v566 = vsub.s32 0, %v565
    %v567 = vrot.slane %v563, %v566
    %v584 = vunpack.c.l.b16 %v547
    %v585 = vunpack.c.l.b16 %v548
    %v586 = vunpack.c.l.b16 %v549
    %v587 = vunpack.c.l.b16 %v550
    %v588 = vunpack.c.l.b16 %v551
    %v589 = vunpack.c.l.b16 %v552
    %v590 = vunpack.c.l.b16 %v553
    %v591 = vunpack.c.l.b16 %v554
    %v592 = vunpack.c.l.b16 %v555
    %v593 = vunpack.c.l.b16 %v556
    %v594 = vunpack.c.l.b16 %v557
    %v595 = vunpack.c.l.b16 %v558
    %v596 = vunpack.c.l.b16 %v559
    %v597 = vunpack.c.l.b16 %v560
    %v598 = vunpack.c.l.b16 %v561
    %v599 = vunpack.c.l.b16 %v562
    %v600 = vpack.c.b16 %v585, %v584
    %v601 = vpack.c.b16 %v587, %v586
    %v602 = vpack.c.b16 %v589, %v588
    %v603 = vpack.c.b16 %v591, %v590
    %v604 = vpack.c.b16 %v593, %v592
    %v605 = vpack.c.b16 %v595, %v594
    %v606 = vpack.c.b16 %v597, %v596
    %v607 = vpack.c.b16 %v599, %v598
    %616 = vmatprep.subr.bf16.mxu0 0
    %617 = vmatpush1.bf16.msra.mxu0 %v600
    %618 = vmatprep.subr.bf16.mxu0 0
    %619 = vmatpush1.bf16.msra.mxu0 %v601
    %620 = vmatprep.subr.bf16.mxu0 0
    %621 = vmatpush1.bf16.msra.mxu0 %v602
    %622 = vmatprep.subr.bf16.mxu0 0
    %623 = vmatpush1.bf16.msra.mxu0 %v603
    %624 = vmatprep.subr.bf16.mxu0 0
    %625 = vmatpush1.bf16.msra.mxu0 %v604
    %626 = vmatprep.subr.bf16.mxu0 0
    %627 = vmatpush1.bf16.msra.mxu0 %v605
    %628 = vmatprep.subr.bf16.mxu0 0
    %629 = vmatpush1.bf16.msra.mxu0 %v606
    %630 = vmatprep.subr.bf16.mxu0 0
    %631 = vmatpush1.bf16.msra.mxu0 %v607
    %632 = vmatprep.subr.bf16.mxu0 0
    %633 = vmatpush1.bf16.msra.mxu0 0
    %634 = vmatprep.subr.bf16.mxu0 0
    %635 = vmatpush1.bf16.msra.mxu0 0
    %636 = vmatprep.subr.bf16.mxu0 0
    %637 = vmatpush1.bf16.msra.mxu0 0
    %638 = vmatprep.subr.bf16.mxu0 0
    %639 = vmatpush1.bf16.msra.mxu0 0
    %640 = vmatprep.subr.bf16.mxu0 0
    %641 = vmatpush1.bf16.msra.mxu0 0
    %642 = vmatprep.subr.bf16.mxu0 0
    %643 = vmatpush1.bf16.msra.mxu0 0
    %644 = vmatprep.subr.bf16.mxu0 0
    %645 = vmatpush1.bf16.msra.mxu0 0
    %646 = vmatprep.subr.bf16.mxu0 0
    %647 = vmatpush1.bf16.msra.mxu0 0
    %648 = vmatprep.mubr.bf16.mxu0 0
    %649 = vmatmul.mubr.bf16.gmra.mrb[0].mxu0 %v546
    %v650 = vpop.f32.mrb[0].mxu0
    %v651 = vadd.f32 %v567, %v650
    %v652 = vpop.f32.mrb[0].mxu0
    %v653 = vpop.f32.mrb[0].mxu0
    %v654 = vadd.f32 %v567, %v653
    %v655 = vpop.f32.mrb[0].mxu0
    %656 = vdwg.mxu0
    %657 = vst [vmem:[#allocation7] sm:$0xff] %v651
    %658 = vst [vmem:[#allocation7 + $0x8] sm:$0xff] %v654
    // Predicated region
    $region38: #{tpu_custom_call.1} parent=1 // pred_check
      _
    $region39: #{tpu_custom_call.1} parent=1 // pred_check_branch
      %660 = sbr.rel (0) target = $region41
    $region40: #{tpu_custom_call.1} parent=1 // pred_region
      %s662 = ssub.s32 256, 256
      %663 = vsyncadd [#allocation4], %s662
      %s664 = sshll.u32 [#allocation7], 4
      %s665 = int_to_ptr.vmem [resolvable:$true] %s664
      %670 = dma.vmem_to_hbm [thread:$0]  %s665, 256, %s7, [#allocation4], 128, 128, 8
    $region41: #{tpu_custom_call.1} parent=1 // pred_fallthru
      _
    // Predicated region
    $region42: #{tpu_custom_call.1} parent=1 // pred_check
      _
    $region43: #{tpu_custom_call.1} parent=1 // pred_check_branch
      %672 = sbr.rel (0) target = $region45
    $region44: #{tpu_custom_call.1} parent=1 // pred_region
      %s674 = ssub.s32 1024, 1024
      %675 = vsyncadd [#allocation9], %s674
      %s676 = sshll.u32 [#allocation8], 4
      %s677 = int_to_ptr.vmem [resolvable:$true] %s676
      %682 = dma.vmem_to_hbm [thread:$0]  %s677, 1024, %s8, [#allocation9], 256, 256, 16
    $region45: #{tpu_custom_call.1} parent=1 // pred_fallthru
      _
    // Predicated region
    $region46: #{tpu_custom_call.1} parent=1 // pred_check
      _
    $region47: #{tpu_custom_call.1} parent=1 // pred_check_branch
      %684 = sbr.rel (0) target = $region49
    $region48: #{tpu_custom_call.1} parent=1 // pred_region
      %685 = dma.done [#allocation4], 256
    $region49: #{tpu_custom_call.1} parent=1 // pred_fallthru
      _
    // Predicated region
    $region50: #{tpu_custom_call.1} parent=1 // pred_check
      _
    $region51: #{tpu_custom_call.1} parent=1 // pred_check_branch
      %687 = sbr.rel (0) target = $region53
    $region52: #{tpu_custom_call.1} parent=1 // pred_region
      %688 = dma.done [#allocation9], 1024
    $region53: #{tpu_custom_call.1} parent=1 // pred_fallthru
      _
    %689 = vsyncpa [#allocation3], 1
    %690 = vsyncpa [#allocation6], 1
    %691 = vsyncpa [#allocation4], 1
    %692 = vsyncpa [#allocation9], 1

</llo_original>
